<compile_context>
chip_gen: v7x
topology: tpu7x:2x2x1
jax: 0.10.0
libtpu: 0.0.40
codegen_flags: <defaults>
</compile_context>

<pallas_src>
import jax
import jax.numpy as jnp
from jax import lax
from jax.experimental import pallas as pl
from jax.experimental.pallas import tpu as pltpu

KSIZE = 3
STRIDE = 1
PAD = 1
LANE = 128                        # TPU lane width
SUBLANE = 8                       # TPU sublane width
VMEM_BUDGET = 20 * 1024 * 1024    # per-step working-set target (fits every gen)
VMEM_LIMIT = 32 * 1024 * 1024     # scoped VMEM limit (safe on v5e/v6e/v7x)


def _round_up(x, m):
    return ((x + m - 1) // m) * m


def _sigmoid(x):
    # exp on the EUP, divide as an approx reciprocal (also EUP slot).
    return pl.reciprocal(1.0 + jnp.exp(-x), approx=True)


# ---------------------------------------------------------------------------
# Path A: small Cin.  Taps folded into K before lane padding (wrapper im2col);
# the kernel is a lane-dense matmul + bias + sigmoid over flattened pixels.
# ---------------------------------------------------------------------------
def _matmul_bias_sigmoid_kernel(p_ref, w_ref, b_ref, o_ref):
    # p_ref: (tile_m, K_p)    bf16 im2col patches
    # w_ref: (K_p, Cout_p)    bf16 (resident: constant index_map)
    # b_ref: (1, Cout_p)      f32
    # o_ref: (tile_m, Cout_p) bf16
    acc = jnp.dot(p_ref[...], w_ref[...], preferred_element_type=jnp.float32)
    acc = acc + b_ref[...]
    o_ref[...] = _sigmoid(acc).astype(o_ref.dtype)


def _pick_m_tile(m, k_p, cout_p):
    # Big M per step amortizes the ~0.35us/step overhead and the resident
    # weights; keep >= 2 steps when m allows (v7x megacore) and stay inside
    # the per-step VMEM budget (v7x has only 64 MiB physical VMEM).
    if m >= 8192:
        tile = 4096
    elif m >= 512:
        tile = _round_up(-(-m // 2), SUBLANE)           # ceil(m/2), 2 steps
    else:
        tile = max(SUBLANE, _round_up(m, SUBLANE))      # single step
    while tile > SUBLANE:
        need = (2 * tile * k_p * 2          # double-buffered bf16 input tiles
                + 2 * tile * cout_p * 2     # double-buffered bf16 output tiles
                + tile * cout_p * 4         # f32 accumulator intermediate
                + 2 * k_p * cout_p * 2      # weights (double-buffered)
                + 2 * cout_p * 4)           # bias
        if need <= VMEM_BUDGET:
            break
        tile = max(SUBLANE, _round_up(tile // 2, SUBLANE))
    return tile


def _conv_sigmoid_im2col(x_nchw, weight_oihw, bias, cin, cout):
    N, _, H, W = x_nchw.shape
    K = KSIZE * KSIZE * cin
    k_p = _round_up(K, LANE)
    cout_p = _round_up(cout, LANE)
    M = N * H * W

    # Layout glue (fused by XLA): NCHW -> NHWC, bf16, 1px halo, im2col on
    # UNPADDED channels, then a single pad of K up to the lane width.
    xhwc = jnp.transpose(x_nchw, (0, 2, 3, 1)).astype(jnp.bfloat16)
    xpad = jnp.pad(xhwc, ((0, 0), (PAD, PAD), (PAD, PAD), (0, 0)))
    taps = [xpad[:, kh:kh + H, kw:kw + W, :]
            for kh in range(KSIZE) for kw in range(KSIZE)]
    patches = jnp.concatenate(taps, axis=-1).reshape(M, K)   # (M, 9*Cin)

    tile_m = _pick_m_tile(M, k_p, cout_p)
    m_pad = _round_up(M, tile_m)
    patches = jnp.pad(patches, ((0, m_pad - M), (0, k_p - K)))

    # Weights: OIHW -> (kh, kw, cin, cout) -> (9*cin, cout), pad once.
    w = jnp.transpose(weight_oihw, (2, 3, 1, 0)).astype(jnp.bfloat16)
    w = w.reshape(K, cout)
    w = jnp.pad(w, ((0, k_p - K), (0, cout_p - cout)))
    b = jnp.pad(bias.astype(jnp.float32), (0, cout_p - cout)).reshape(1, cout_p)

    out = pl.pallas_call(
        _matmul_bias_sigmoid_kernel,
        out_shape=jax.ShapeDtypeStruct((m_pad, cout_p), jnp.bfloat16),
        grid_spec=pltpu.PrefetchScalarGridSpec(
            num_scalar_prefetch=0,
            grid=(m_pad // tile_m,),
            in_specs=[
                pl.BlockSpec((tile_m, k_p), lambda i: (i, 0)),
                # Constant index_maps: weights/bias are not re-DMA'd per step.
                pl.BlockSpec((k_p, cout_p), lambda i: (0, 0)),
                pl.BlockSpec((1, cout_p), lambda i: (0, 0)),
            ],
            out_specs=pl.BlockSpec((tile_m, cout_p), lambda i: (i, 0)),
        ),
        compiler_params=pltpu.CompilerParams(
            dimension_semantics=("parallel",),
            vmem_limit_bytes=VMEM_LIMIT),
    )(patches, w, b)

    out = out[:M, :cout].reshape(N, H, W, cout)
    return jnp.transpose(out, (0, 3, 1, 2)).astype(x_nchw.dtype)


# ---------------------------------------------------------------------------
# Path B: large Cin.  Channel-padded NHWC row tiles (pre-haloed in the
# wrapper), 9 per-tap matmuls accumulated in f32 -- no im2col patch.
# ---------------------------------------------------------------------------
def _conv_sigmoid_taps_kernel(x_ref, w_ref, b_ref, o_ref):
    # x_ref: (1, th+2, W+2, Cin_p) bf16 pre-haloed row tile
    # w_ref: (9, Cin_p, Cout_p)    bf16 (resident)
    # b_ref: (1, Cout_p)           f32
    # o_ref: (1, th, W, Cout_p)    bf16
    _, th, w_dim, cout_p = o_ref.shape
    cin_p = x_ref.shape[3]
    m = th * w_dim
    acc = jnp.zeros((m, cout_p), jnp.float32)
    # Per-tap accumulation: tap copies overlap the MXU push; accumulation in
    # place is native on v7x's MRB and cheap enough on v5e/v6e at K=Cin_p>=128.
    for kh in range(KSIZE):
        for kw in range(KSIZE):
            tap = x_ref[:, kh:kh + th, kw:kw + w_dim, :].reshape(m, cin_p)
            acc = acc + jnp.dot(tap, w_ref[kh * KSIZE + kw],
                                preferred_element_type=jnp.float32)
    acc = acc + b_ref[...]
    o_ref[...] = _sigmoid(acc).reshape(1, th, w_dim, cout_p).astype(o_ref.dtype)


def _pick_row_tile(h, w, cin_p, cout_p):
    wp = w + 2 * PAD
    th = h
    while True:
        need = (2 * (th + 2) * wp * cin_p * 2   # double-buffered bf16 input tile
                + 2 * th * w * cout_p * 2       # double-buffered bf16 output tile
                + th * w * cout_p * 4           # f32 accumulator
                + 2 * KSIZE * KSIZE * cin_p * cout_p * 2  # weights
                + 2 * cout_p * 4)               # bias
        if need <= VMEM_BUDGET or th <= SUBLANE:
            break
        th = max(SUBLANE, -(-th // 2))
    return th


def _conv_sigmoid_pertap(x_nchw, weight_oihw, bias, cin, cout):
    N, _, H, W = x_nchw.shape
    cin_p = _round_up(cin, LANE)
    cout_p = _round_up(cout, LANE)
    th = _pick_row_tile(H, W, cin_p, cout_p)
    h_pad = _round_up(H, th)
    nrt = h_pad // th
    wp = W + 2 * PAD

    # NCHW -> NHWC, bf16, halo + row/channel pad, then pre-haloed overlapping
    # row tiles so the grid's BlockSpec stays plainly blocked.
    xhwc = jnp.transpose(x_nchw, (0, 2, 3, 1)).astype(jnp.bfloat16)
    xpad = jnp.pad(xhwc, ((0, 0), (PAD, PAD + h_pad - H), (PAD, PAD),
                          (0, cin_p - cin)))             # (N, h_pad+2, wp, cin_p)
    tiles = jnp.stack([xpad[:, t * th: t * th + th + 2] for t in range(nrt)],
                      axis=1)                            # (N, nrt, th+2, wp, cin_p)
    tiles = tiles.reshape(N * nrt, th + 2, wp, cin_p)

    w = jnp.transpose(weight_oihw, (2, 3, 1, 0)).astype(jnp.bfloat16)
    w = jnp.pad(w, ((0, 0), (0, 0), (0, cin_p - cin), (0, cout_p - cout)))
    w = w.reshape(KSIZE * KSIZE, cin_p, cout_p)
    b = jnp.pad(bias.astype(jnp.float32), (0, cout_p - cout)).reshape(1, cout_p)

    out = pl.pallas_call(
        _conv_sigmoid_taps_kernel,
        out_shape=jax.ShapeDtypeStruct((N * nrt, th, W, cout_p), jnp.bfloat16),
        grid_spec=pltpu.PrefetchScalarGridSpec(
            num_scalar_prefetch=0,
            grid=(N * nrt,),
            in_specs=[
                pl.BlockSpec((1, th + 2, wp, cin_p), lambda i: (i, 0, 0, 0)),
                pl.BlockSpec((KSIZE * KSIZE, cin_p, cout_p),
                             lambda i: (0, 0, 0)),
                pl.BlockSpec((1, cout_p), lambda i: (0, 0)),
            ],
            out_specs=pl.BlockSpec((1, th, W, cout_p), lambda i: (i, 0, 0, 0)),
        ),
        compiler_params=pltpu.CompilerParams(
            dimension_semantics=("parallel",),
            vmem_limit_bytes=VMEM_LIMIT),
    )(tiles, w, b)

    out = out.reshape(N, nrt * th, W, cout_p)[:, :H, :, :cout]
    return jnp.transpose(out, (0, 3, 1, 2)).astype(x_nchw.dtype)


def conv_sigmoid_pallas(x_nchw, weight_oihw, bias):
    """Conv2d(k=3, s=1, p=1) + Sigmoid fused on TPU via Pallas.

    x_nchw: (N, Cin, H, W); weight_oihw: (Cout, Cin, 3, 3); bias: (Cout,).
    Returns (N, Cout, H, W) in x's dtype.
    """
    cin = x_nchw.shape[1]
    cout = weight_oihw.shape[0]
    # Small Cin: folding the taps into K before lane padding costs no extra
    # input HBM bytes and cuts MXU K / weight size ~9x.  Large Cin: wrapper
    # im2col would multiply input HBM traffic, so per-tap accumulation wins.
    if _round_up(KSIZE * KSIZE * cin, LANE) <= 2 * _round_up(cin, LANE):
        return _conv_sigmoid_im2col(x_nchw, weight_oihw, bias, cin, cout)
    return _conv_sigmoid_pertap(x_nchw, weight_oihw, bias, cin, cout)


def init_params(key, in_channels, out_channels, ksize=KSIZE):
    """Deterministic init matching the PyTorch module:
    weight: kaiming_normal_ (fan_in = Cin*kh*kw, gain=sqrt(2));
    bias:   default Conv2d init U(-1/sqrt(fan_in), 1/sqrt(fan_in))."""
    kw_key, b_key = jax.random.split(key)
    fan_in = in_channels * ksize * ksize
    std = (2.0 / fan_in) ** 0.5
    weight = std * jax.random.normal(
        kw_key, (out_channels, in_channels, ksize, ksize), jnp.float32)
    bound = 1.0 / (fan_in ** 0.5)
    bias = jax.random.uniform(
        b_key, (out_channels,), jnp.float32, minval=-bound, maxval=bound)
    return weight, bias


def reference(x_nchw, weight_oihw, bias):
    """Plain-JAX f32 reference (NCHW conv + bias + sigmoid)."""
    out = lax.conv_general_dilated(
        x_nchw, weight_oihw,
        window_strides=(STRIDE, STRIDE),
        padding=((PAD, PAD), (PAD, PAD)),
        dimension_numbers=("NCHW", "OIHW", "NCHW"))
    out = out + bias.reshape(1, -1, 1, 1)
    return jax.nn.sigmoid(out)


if __name__ == "__main__":
    key = jax.random.PRNGKey(0)

    def check(n, cin, cout, h, w, k):
        x_key, p_key = jax.random.split(k)
        x = jax.random.normal(x_key, (n, cin, h, w), jnp.float32)
        weight, bias = init_params(p_key, cin, cout)
        out = jax.block_until_ready(conv_sigmoid_pallas(x, weight, bias))
        ref = reference(x, weight, bias)
        assert out.shape == (n, cout, h, w), out.shape
        # bf16 MXU inputs / bf16 output store (f32 accumulation) -> loose tol.
        err = float(jnp.max(jnp.abs(out - ref)))
        assert jnp.allclose(out, ref, atol=2e-2, rtol=2e-2), (n, cin, cout, h, w, err)

    k1, k2, k3 = jax.random.split(key, 3)
    # Spec shape: small Cin -> K-folded im2col path.
    check(2, 4, 8, 16, 16, k1)
    # Odd shapes: exercises M padding on the im2col path.
    check(1, 3, 5, 7, 9, k2)
    # Large Cin -> per-tap accumulation path (row-tiled, channel-padded).
    check(1, 160, 8, 8, 8, k3)

    print("KERNEL_OK")
</pallas_src>

<mosaic_0001>
module attributes {stable_mosaic.version = 11 : i64} {
  func.func @_matmul_bias_sigmoid_kernel(%arg0: i32, %arg1: memref<256x128xbf16, #tpu.memory_space<vmem>>, %arg2: memref<128x128xbf16, #tpu.memory_space<vmem>>, %arg3: memref<1x128xf32, #tpu.memory_space<vmem>>, %arg4: memref<256x128xbf16, #tpu.memory_space<vmem>>) attributes {dimension_semantics = [#tpu.dimension_semantics<parallel>], iteration_bounds = array<i64: 2>, scalar_prefetch = 0 : i64, scratch_operands = 0 : i64, tpu.core_type = #tpu.core_type<tc>, window_params = [{transform_indices = @transform_0, window_bounds = array<i64: 256, 128>}, {pipeline_mode = #tpu.pipeline_mode<synchronous>, transform_indices = @transform_1, window_bounds = array<i64: 128, 128>}, {pipeline_mode = #tpu.pipeline_mode<synchronous>, transform_indices = @transform_2, window_bounds = array<i64: 1, 128>}, {transform_indices = @transform_3, window_bounds = array<i64: 256, 128>}]} {
    %c0 = arith.constant 0 : index
    %c0_0 = arith.constant 0 : index
    %0 = vector.load %arg1[%c0, %c0_0] : memref<256x128xbf16, #tpu.memory_space<vmem>>, vector<256x128xbf16>
    %c0_1 = arith.constant 0 : index
    %c0_2 = arith.constant 0 : index
    %1 = vector.load %arg2[%c0_1, %c0_2] : memref<128x128xbf16, #tpu.memory_space<vmem>>, vector<128x128xbf16>
    %cst = arith.constant dense<0.000000e+00> : vector<256x128xf32>
    %2 = tpu.matmul %0, %1, %cst {dimension_numbers = #tpu.dot_dimension_numbers<[1], [0], [0], [1], [0, 0, 1, 1], [], []>} : vector<256x128xbf16>, vector<128x128xbf16>, vector<256x128xf32> -> vector<256x128xf32>
    %c0_3 = arith.constant 0 : index
    %c0_4 = arith.constant 0 : index
    %3 = vector.load %arg3[%c0_3, %c0_4] : memref<1x128xf32, #tpu.memory_space<vmem>>, vector<1x128xf32>
    %4 = vector.broadcast %3 : vector<1x128xf32> to vector<256x128xf32>
    %5 = arith.addf %2, %4 : vector<256x128xf32>
    %cst_5 = arith.constant 0.000000e+00 : f32
    %6 = vector.broadcast %cst_5 : f32 to vector<256x128xf32>
    %7 = arith.subf %6, %5 : vector<256x128xf32>
    %8 = math.exp %7 : vector<256x128xf32>
    %cst_6 = arith.constant 1.000000e+00 : f32
    %9 = vector.broadcast %cst_6 : f32 to vector<256x128xf32>
    %10 = arith.addf %9, %8 : vector<256x128xf32>
    %11 = tpu.reciprocal %10 {approx = true} : vector<256x128xf32> -> vector<256x128xf32>
    %12 = arith.truncf %11 : vector<256x128xf32> to vector<256x128xbf16>
    %c0_7 = arith.constant 0 : index
    %c0_8 = arith.constant 0 : index
    %13 = vector.load %arg4[%c0_7, %c0_8] : memref<256x128xbf16, #tpu.memory_space<vmem>>, vector<256x128xbf16>
    tpu.vector_store %arg4[%c0_7, %c0_8], %12 {strides = array<i32>} : memref<256x128xbf16, #tpu.memory_space<vmem>>, vector<256x128xbf16>,
    return
  }
  func.func @transform_0(%arg0: i32) -> (i32, i32) {
    %c0_i32 = arith.constant 0 : i32
    %c0_i32_0 = arith.constant 0 : i32
    return %arg0, %c0_i32 : i32, i32
  }
  func.func @transform_1(%arg0: i32) -> (i32, i32) {
    %c0_i32 = arith.constant 0 : i32
    %c0_i32_0 = arith.constant 0 : i32
    %c0_i32_1 = arith.constant 0 : i32
    return %c0_i32, %c0_i32_0 : i32, i32
  }
  func.func @transform_2(%arg0: i32) -> (i32, i32) {
    %c0_i32 = arith.constant 0 : i32
    %c0_i32_0 = arith.constant 0 : i32
    %c0_i32_1 = arith.constant 0 : i32
    return %c0_i32, %c0_i32_0 : i32, i32
  }
  func.func @transform_3(%arg0: i32) -> (i32, i32) {
    %c0_i32 = arith.constant 0 : i32
    %c0_i32_0 = arith.constant 0 : i32
    return %arg0, %c0_i32 : i32, i32
  }
}

</mosaic_0001>

<llo_original>
// kernel: tpu_custom_call.1
$region0: #{tpu_custom_call.1}
  #allocation0 [shape = 'u32[]', space=smem, size = 0x4, offset = 0x4, fixed_abs, tag = 'smem constant byte address 0x4 - core index']
  #allocation1 [shape = 'u32[144,128]{1,0:T(1,128)}', space=vmem, size = 0x12000, scoped, tag = 'internal scratch']
  %s0 = inlined_call_operand.hbm [shape: bf16[512,128], index: 0, kind: input, shape index: {}]
  %s1 = inlined_call_operand.hbm [shape: bf16[128,128], index: 1, kind: input, shape index: {}]
  %s2 = inlined_call_operand.vmem [shape: f32[1,128], index: 2, kind: input, shape index: {}]
  %s3 = inlined_call_operand.hbm [shape: bf16[512,128], index: 3, kind: output, shape index: {}]
  %s4 = sld [smem:[#allocation0]]
  $region53: #{tpu_custom_call.1} parent=0
    _
  %s6 = ssub.s32 1, %s4
  %s7 = scalar_select 0, %s6, %s4
  $region1: #{tpu_custom_call.1} parent=0
    #allocation2 [shape = 'u8[131072]{0}', space=vmem, size = 0x20000, scoped, tag = 'input window, operand 0']
    #allocation3 [shape = 's32[2]{0}', space=sflag, size = 0x8, scoped, tag = 'scoped memory for tpu_custom_call.1']
    #allocation4 [shape = 's32[2]{0}', space=sflag, size = 0x8, scoped, tag = 'scoped memory for tpu_custom_call.1']
    #allocation5 [shape = 'u8[32768]{0}', space=vmem, size = 0x8000, scoped, tag = 'input window, operand 1, single buffered']
    #allocation6 [shape = 's32[1]{0}', space=sflag, size = 0x4, scoped, tag = 'scoped memory for tpu_custom_call.1']
    #allocation7 [shape = 'u8[131072]{0}', space=vmem, size = 0x20000, scoped, tag = 'output window, operand 0']
    %8 = vsyncpa [#allocation3], 0
    %s9 = scalar_lea.sflag [#allocation3], 1
    %10 = vsyncpa %s9, 0
    %11 = vsyncpa [#allocation6], 0
    %12 = vsyncpa [#allocation4], 0
    %s13 = scalar_lea.sflag [#allocation4], 1
    %14 = vsyncpa %s13, 0
    loop: start=0, step=1, limit=4
    $region2: #{tpu_custom_call.1} parent=1 // loop_pre_header
      _
    $region3: #{tpu_custom_call.1} parent=1 // loop_header
      %s16 = sphi 0, %s20
      %p17 = scmp.ge.s32.totalorder %s16, 4
      %s26 = sphi 0, %s28
      %s29 = sphi 0, %s26
      %s30 = sphi 0, %s29
      %s46 = sphi 0, %s30
      %s50 = sphi 0, %s50
      %s52 = sphi 0, %s50
      %s53 = sphi 0, %s52
      %s67 = sphi 0, %s53
      %s71 = sphi 0, %s71
      %s73 = sphi 0, %s71
      %s74 = sphi 0, %s73
      %s88 = sphi 0, %s74
      %s94 = sphi 0, %s96
      %s97 = sphi 0, %s94
      %s98 = sphi 0, %s97
      %s114 = sphi 0, %s98
    $region4: #{tpu_custom_call.1} parent=1 // loop_header_branch
      %19 = sbr.rel (%p17) target = $region8
    $region5: #{tpu_custom_call.1} parent=1 // loop_body
      %s21 = ssub.s32 %s16, 1
      %s22 = ssub.s32 %s16, 2
      %s23 = sadd.s32 %s16, 1
      %s24 = ssub.s32 %s16, %s23
      %p25 = scmp.eq.s32.totalorder %s24, 0
      %s27 = sadd.s32 %s26, 1
      %s28 = scalar_select %p25, %s26, %s27
      %p31 = pneg %p25
      %p32 = scmp.eq.s32.totalorder %s16, 1
      %p33 = por %p31, %p32
      %p34 = scmp.ne.s32.totalorder %s26, %s29
      %p35 = scmp.eq.s32.totalorder %s16, 0
      %p36 = por %p34, %p35
      %p37 = scmp.ne.s32.totalorder %s26, %s29
      %p38 = scmp.eq.s32.totalorder %s21, 1
      %p39 = por %p37, %p38
      %p40 = scmp.ne.s32.totalorder %s29, %s30
      %p41 = scmp.eq.s32.totalorder %s21, 0
      %p42 = por %p40, %p41
      %p43 = scmp.ne.s32.totalorder %s29, %s30
      %p44 = scmp.eq.s32.totalorder %s22, 1
      %p45 = por %p43, %p44
      %p47 = scmp.ne.s32.totalorder %s30, %s46
      %p48 = scmp.eq.s32.totalorder %s22, 0
      %p49 = por %p47, %p48
      %s51 = sadd.s32 %s50, 1
      %p54 = scmp.eq.s32.totalorder %s16, 1
      %p55 = scmp.ne.s32.totalorder %s50, %s52
      %p56 = scmp.eq.s32.totalorder %s16, 0
      %p57 = por %p55, %p56
      %p58 = scmp.ne.s32.totalorder %s50, %s52
      %p59 = scmp.eq.s32.totalorder %s21, 1
      %p60 = por %p58, %p59
      %p61 = scmp.ne.s32.totalorder %s52, %s53
      %p62 = scmp.eq.s32.totalorder %s21, 0
      %p63 = por %p61, %p62
      %p64 = scmp.ne.s32.totalorder %s52, %s53
      %p65 = scmp.eq.s32.totalorder %s22, 1
      %p66 = por %p64, %p65
      %p68 = scmp.ne.s32.totalorder %s53, %s67
      %p69 = scmp.eq.s32.totalorder %s22, 0
      %p70 = por %p68, %p69
      %s72 = sadd.s32 %s71, 1
      %p75 = scmp.eq.s32.totalorder %s16, 1
      %p76 = scmp.ne.s32.totalorder %s71, %s73
      %p77 = scmp.eq.s32.totalorder %s16, 0
      %p78 = por %p76, %p77
      %p79 = scmp.ne.s32.totalorder %s71, %s73
      %p80 = scmp.eq.s32.totalorder %s21, 1
      %p81 = por %p79, %p80
      %p82 = scmp.ne.s32.totalorder %s73, %s74
      %p83 = scmp.eq.s32.totalorder %s21, 0
      %p84 = por %p82, %p83
      %p85 = scmp.ne.s32.totalorder %s73, %s74
      %p86 = scmp.eq.s32.totalorder %s22, 1
      %p87 = por %p85, %p86
      %p89 = scmp.ne.s32.totalorder %s74, %s88
      %p90 = scmp.eq.s32.totalorder %s22, 0
      %p91 = por %p89, %p90
      %s92 = ssub.s32 %s16, %s23
      %p93 = scmp.eq.s32.totalorder %s92, 0
      %s95 = sadd.s32 %s94, 1
      %s96 = scalar_select %p93, %s94, %s95
      %p99 = pneg %p93
      %p100 = scmp.eq.s32.totalorder %s16, 1
      %p101 = por %p99, %p100
      %p102 = scmp.ne.s32.totalorder %s94, %s97
      %p103 = scmp.eq.s32.totalorder %s16, 0
      %p104 = por %p102, %p103
      %p105 = scmp.ne.s32.totalorder %s94, %s97
      %p106 = scmp.eq.s32.totalorder %s21, 1
      %p107 = por %p105, %p106
      %p108 = scmp.ne.s32.totalorder %s97, %s98
      %p109 = scmp.eq.s32.totalorder %s21, 0
      %p110 = por %p108, %p109
      %p111 = scmp.ne.s32.totalorder %s97, %s98
      %p112 = scmp.eq.s32.totalorder %s22, 1
      %p113 = por %p111, %p112
      %p115 = scmp.ne.s32.totalorder %s98, %s114
      %p116 = scmp.eq.s32.totalorder %s22, 0
      %p117 = por %p115, %p116
      %p118 = scmp.le.s32.totalorder 1, %s16
      %p119 = scmp.lt.s32.totalorder %s16, 3
      %p120 = pnand %p118, %p119
      %p121 = pneg %p120
      // Predicated region
      $region9: #{tpu_custom_call.1} parent=5 // pred_check
        _
      $region10: #{tpu_custom_call.1} parent=5 // pred_check_branch
        %123 = sbr.rel (%p120) target = $region12
      $region11: #{tpu_custom_call.1} parent=5 // pred_region
        %s124 = ssub.s32 %s16, 1
        // Predicated region
        $region13: #{tpu_custom_call.1} parent=11 // pred_check
          %p125 = pneg %p63
        $region14: #{tpu_custom_call.1} parent=11 // pred_check_branch
          %127 = sbr.rel (%p125) target = $region16
        $region15: #{tpu_custom_call.1} parent=11 // pred_region
          %s129 = ssub.s32 1024, 1024
          %130 = vsyncadd [#allocation6], %s129
          %s131 = sshll.u32 [#allocation5], 4
          %s132 = int_to_ptr.vmem [resolvable:$true] %s131
          %137 = dma.hbm_to_vmem [thread:$0]  %s1, 1024, %s132, [#allocation6], 64, 64, 4
        $region16: #{tpu_custom_call.1} parent=11 // pred_fallthru
          _
        // Predicated region
        $region17: #{tpu_custom_call.1} parent=11 // pred_check
          %p138 = pneg %p84
        $region18: #{tpu_custom_call.1} parent=11 // pred_check_branch
          %140 = sbr.rel (%p138) target = $region20
        $region19: #{tpu_custom_call.1} parent=11 // pred_region
          _
        $region20: #{tpu_custom_call.1} parent=11 // pred_fallthru
          _
      $region12: #{tpu_custom_call.1} parent=5 // pred_fallthru
        _
      %p141 = scmp.lt.s32.totalorder %s16, 2
      // Predicated region
      $region21: #{tpu_custom_call.1} parent=5 // pred_check
        %p142 = pneg %p141
      $region22: #{tpu_custom_call.1} parent=5 // pred_check_branch
        %144 = sbr.rel (%p142) target = $region24
      $region23: #{tpu_custom_call.1} parent=5 // pred_region
        // Predicated region
        $region25: #{tpu_custom_call.1} parent=23 // pred_check
          %p145 = pneg %p36
        $region26: #{tpu_custom_call.1} parent=23 // pred_check_branch
          %147 = sbr.rel (%p145) target = $region28
        $region27: #{tpu_custom_call.1} parent=23 // pred_region
          %s148 = sand.u32 %s26, 1
          %s149 = scalar_lea.sflag [#allocation3], %s148
          %s150 = sand.u32 %s26, 1
          %s151 = smul.addr %s150, 128
          %s152 = scalar_lea.vmem [#allocation2], %s151
          %s153 = smul.u32 32, %s16
          %s155 = ssub.s32 2048, 2048
          %156 = vsyncadd %s149, %s155
          %s157 = smul.addr %s153, 64
          %s158 = scalar_lea.hbm %s0, %s157
          %s159 = sshll.u32 %s152, 4
          %s160 = int_to_ptr.vmem [resolvable:$true] %s159
          %165 = dma.hbm_to_vmem [thread:$0]  %s158, 2048, %s160, %s149, 64, 64, 4
        $region28: #{tpu_custom_call.1} parent=23 // pred_fallthru
          _
      $region24: #{tpu_custom_call.1} parent=5 // pred_fallthru
        _
      %p166 = scmp.le.s32.totalorder 1, %s16
      %p167 = scmp.lt.s32.totalorder %s16, 3
      %p168 = pnand %p166, %p167
      %p169 = pneg %p168
      // Predicated region
      $region29: #{tpu_custom_call.1} parent=5 // pred_check
        _
      $region30: #{tpu_custom_call.1} parent=5 // pred_check_branch
        %171 = sbr.rel (%p168) target = $region32
      $region31: #{tpu_custom_call.1} parent=5 // pred_region
        %s172 = ssub.s32 %s16, 1
        %s173 = sand.u32 %s29, 1
        %s174 = scalar_lea.sflag [#allocation3], %s173
        %s175 = sand.u32 %s29, 1
        %s176 = smul.addr %s175, 128
        %s177 = scalar_lea.vmem [#allocation2], %s176
        // Predicated region
        $region33: #{tpu_custom_call.1} parent=31 // pred_check
          %p178 = pneg %p42
        $region34: #{tpu_custom_call.1} parent=31 // pred_check_branch
          %180 = sbr.rel (%p178) target = $region36
        $region35: #{tpu_custom_call.1} parent=31 // pred_region
          %181 = dma.done %s174, 2048
        $region36: #{tpu_custom_call.1} parent=31 // pred_fallthru
          _
        // Predicated region
        $region37: #{tpu_custom_call.1} parent=31 // pred_check
          %p182 = pneg %p63
        $region38: #{tpu_custom_call.1} parent=31 // pred_check_branch
          %184 = sbr.rel (%p182) target = $region40
        $region39: #{tpu_custom_call.1} parent=31 // pred_region
          %185 = dma.done [#allocation6], 1024
        $region40: #{tpu_custom_call.1} parent=31 // pred_fallthru
          _
        %s186 = sand.u32 %s29, 1
        %s187 = scalar_lea.sflag [#allocation3], %s186
        %s188 = sand.u32 %s29, 1
        %s189 = smul.addr %s188, 128
        %s190 = scalar_lea.vmem [#allocation2], %s189
        %p191 = pneg %p42
        %p192 = pneg %p39
        %p193 = pneg %p63
        %p194 = pneg %p60
        %p195 = pneg %p84
        %p196 = pneg %p81
        %p197 = pneg %p110
        %p198 = pneg %p107
        %s199 = sand.u32 %s97, 1
        %s200 = scalar_lea.sflag [#allocation4], %s199
        %s201 = sand.u32 %s97, 1
        %s202 = smul.addr %s201, 128
        %s203 = scalar_lea.vmem [#allocation7], %s202
        %s204 = smul.u32 32, %s21
        %s205 = smul.u32 32, %s21
        %v207 = vld [vmem:[%s177] sm:$0xf]
        %v208 = vld [vmem:[%s177 + $0x4] sm:$0xf]
        %v209 = vld [vmem:[%s177 + $0x8] sm:$0xf]
        %v210 = vld [vmem:[%s177 + $0xc] sm:$0xf]
        %v211 = vld [vmem:[%s177 + $0x10] sm:$0xf]
        %v212 = vld [vmem:[%s177 + $0x14] sm:$0xf]
        %v213 = vld [vmem:[%s177 + $0x18] sm:$0xf]
        %v214 = vld [vmem:[%s177 + $0x1c] sm:$0xf]
        %v215 = vld [vmem:[%s177 + $0x20] sm:$0xf]
        %v216 = vld [vmem:[%s177 + $0x24] sm:$0xf]
        %v217 = vld [vmem:[%s177 + $0x28] sm:$0xf]
        %v218 = vld [vmem:[%s177 + $0x2c] sm:$0xf]
        %v219 = vld [vmem:[%s177 + $0x30] sm:$0xf]
        %v220 = vld [vmem:[%s177 + $0x34] sm:$0xf]
        %v221 = vld [vmem:[%s177 + $0x38] sm:$0xf]
        %v222 = vld [vmem:[%s177 + $0x3c] sm:$0xf]
        %v223 = vld [vmem:[%s177 + $0x40] sm:$0xf]
        %v224 = vld [vmem:[%s177 + $0x44] sm:$0xf]
        %v225 = vld [vmem:[%s177 + $0x48] sm:$0xf]
        %v226 = vld [vmem:[%s177 + $0x4c] sm:$0xf]
        %v227 = vld [vmem:[%s177 + $0x50] sm:$0xf]
        %v228 = vld [vmem:[%s177 + $0x54] sm:$0xf]
        %v229 = vld [vmem:[%s177 + $0x58] sm:$0xf]
        %v230 = vld [vmem:[%s177 + $0x5c] sm:$0xf]
        %v231 = vld [vmem:[%s177 + $0x60] sm:$0xf]
        %v232 = vld [vmem:[%s177 + $0x64] sm:$0xf]
        %v233 = vld [vmem:[%s177 + $0x68] sm:$0xf]
        %v234 = vld [vmem:[%s177 + $0x6c] sm:$0xf]
        %v235 = vld [vmem:[%s177 + $0x70] sm:$0xf]
        %v236 = vld [vmem:[%s177 + $0x74] sm:$0xf]
        %v237 = vld [vmem:[%s177 + $0x78] sm:$0xf]
        %v238 = vld [vmem:[%s177 + $0x7c] sm:$0xf]
        %v239 = vld [vmem:[#allocation5] sm:$0xf]
        %v240 = vld [vmem:[#allocation5 + $0x4] sm:$0xf]
        %v241 = vld [vmem:[#allocation5 + $0x8] sm:$0xf]
        %v242 = vld [vmem:[#allocation5 + $0xc] sm:$0xf]
        %v243 = vld [vmem:[#allocation5 + $0x10] sm:$0xf]
        %v244 = vld [vmem:[#allocation5 + $0x14] sm:$0xf]
        %v245 = vld [vmem:[#allocation5 + $0x18] sm:$0xf]
        %v246 = vld [vmem:[#allocation5 + $0x1c] sm:$0xf]
        %v247 = vld [vmem:[#allocation5 + $0x20] sm:$0xf]
        %v248 = vld [vmem:[#allocation5 + $0x24] sm:$0xf]
        %v249 = vld [vmem:[#allocation5 + $0x28] sm:$0xf]
        %v250 = vld [vmem:[#allocation5 + $0x2c] sm:$0xf]
        %v251 = vld [vmem:[#allocation5 + $0x30] sm:$0xf]
        %v252 = vld [vmem:[#allocation5 + $0x34] sm:$0xf]
        %v253 = vld [vmem:[#allocation5 + $0x38] sm:$0xf]
        %v254 = vld [vmem:[#allocation5 + $0x3c] sm:$0xf]
        %v255 = vld [vmem:[%s2] sm:$0x1]
        %v257 = vlaneseq
        %v258 = vshrl.u32 %v257, 7
        %v259 = vsub.s32 0, %v258
        %v260 = vrot.slane %v255, %v259
        %v294 = vunpack.c.l.b16 %v207
        %v295 = vunpack.c.l.b16 %v208
        %v296 = vunpack.c.l.b16 %v209
        %v297 = vunpack.c.l.b16 %v210
        %v298 = vunpack.c.l.b16 %v211
        %v299 = vunpack.c.l.b16 %v212
        %v300 = vunpack.c.l.b16 %v213
        %v301 = vunpack.c.l.b16 %v214
        %v302 = vunpack.c.l.b16 %v215
        %v303 = vunpack.c.l.b16 %v216
        %v304 = vunpack.c.l.b16 %v217
        %v305 = vunpack.c.l.b16 %v218
        %v306 = vunpack.c.l.b16 %v219
        %v307 = vunpack.c.l.b16 %v220
        %v308 = vunpack.c.l.b16 %v221
        %v309 = vunpack.c.l.b16 %v222
        %v310 = vunpack.c.l.b16 %v223
        %v311 = vunpack.c.l.b16 %v224
        %v312 = vunpack.c.l.b16 %v225
        %v313 = vunpack.c.l.b16 %v226
        %v314 = vunpack.c.l.b16 %v227
        %v315 = vunpack.c.l.b16 %v228
        %v316 = vunpack.c.l.b16 %v229
        %v317 = vunpack.c.l.b16 %v230
        %v318 = vunpack.c.l.b16 %v231
        %v319 = vunpack.c.l.b16 %v232
        %v320 = vunpack.c.l.b16 %v233
        %v321 = vunpack.c.l.b16 %v234
        %v322 = vunpack.c.l.b16 %v235
        %v323 = vunpack.c.l.b16 %v236
        %v324 = vunpack.c.l.b16 %v237
        %v325 = vunpack.c.l.b16 %v238
        %v326 = vpack.c.b16 %v295, %v294
        %v327 = vpack.c.b16 %v297, %v296
        %v328 = vpack.c.b16 %v299, %v298
        %v329 = vpack.c.b16 %v301, %v300
        %v330 = vpack.c.b16 %v303, %v302
        %v331 = vpack.c.b16 %v305, %v304
        %v332 = vpack.c.b16 %v307, %v306
        %v333 = vpack.c.b16 %v309, %v308
        %v334 = vpack.c.b16 %v311, %v310
        %v335 = vpack.c.b16 %v313, %v312
        %v336 = vpack.c.b16 %v315, %v314
        %v337 = vpack.c.b16 %v317, %v316
        %v338 = vpack.c.b16 %v319, %v318
        %v339 = vpack.c.b16 %v321, %v320
        %v340 = vpack.c.b16 %v323, %v322
        %v341 = vpack.c.b16 %v325, %v324
        %v374 = vunpack.c.l.b16 %v239
        %v375 = vunpack.c.l.b16 %v240
        %v376 = vunpack.c.l.b16 %v241
        %v377 = vunpack.c.l.b16 %v242
        %v378 = vunpack.c.l.b16 %v243
        %v379 = vunpack.c.l.b16 %v244
        %v380 = vunpack.c.l.b16 %v245
        %v381 = vunpack.c.l.b16 %v246
        %v382 = vunpack.c.l.b16 %v247
        %v383 = vunpack.c.l.b16 %v248
        %v384 = vunpack.c.l.b16 %v249
        %v385 = vunpack.c.l.b16 %v250
        %v386 = vunpack.c.l.b16 %v251
        %v387 = vunpack.c.l.b16 %v252
        %v388 = vunpack.c.l.b16 %v253
        %v389 = vunpack.c.l.b16 %v254
        %v390 = vpack.c.b16 %v375, %v374
        %v391 = vpack.c.b16 %v377, %v376
        %v392 = vpack.c.b16 %v379, %v378
        %v393 = vpack.c.b16 %v381, %v380
        %v394 = vpack.c.b16 %v383, %v382
        %v395 = vpack.c.b16 %v385, %v384
        %v396 = vpack.c.b16 %v387, %v386
        %v397 = vpack.c.b16 %v389, %v388
        %406 = vmatprep.subr.bf16.mxu0 0
        %407 = vmatpush1.bf16.msra.mxu0 %v390
        %408 = vmatprep.subr.bf16.mxu0 0
        %409 = vmatpush1.bf16.msra.mxu0 %v391
        %410 = vmatprep.subr.bf16.mxu0 0
        %411 = vmatpush1.bf16.msra.mxu0 %v392
        %412 = vmatprep.subr.bf16.mxu0 0
        %413 = vmatpush1.bf16.msra.mxu0 %v393
        %414 = vmatprep.subr.bf16.mxu0 0
        %415 = vmatpush1.bf16.msra.mxu0 %v394
        %416 = vmatprep.subr.bf16.mxu0 0
        %417 = vmatpush1.bf16.msra.mxu0 %v395
        %418 = vmatprep.subr.bf16.mxu0 0
        %419 = vmatpush1.bf16.msra.mxu0 %v396
        %420 = vmatprep.subr.bf16.mxu0 0
        %421 = vmatpush1.bf16.msra.mxu0 %v397
        %422 = vmatprep.subr.bf16.mxu0 0
        %423 = vmatpush1.bf16.msra.mxu0 0
        %424 = vmatprep.subr.bf16.mxu0 0
        %425 = vmatpush1.bf16.msra.mxu0 0
        %426 = vmatprep.subr.bf16.mxu0 0
        %427 = vmatpush1.bf16.msra.mxu0 0
        %428 = vmatprep.subr.bf16.mxu0 0
        %429 = vmatpush1.bf16.msra.mxu0 0
        %430 = vmatprep.subr.bf16.mxu0 0
        %431 = vmatpush1.bf16.msra.mxu0 0
        %432 = vmatprep.subr.bf16.mxu0 0
        %433 = vmatpush1.bf16.msra.mxu0 0
        %434 = vmatprep.subr.bf16.mxu0 0
        %435 = vmatpush1.bf16.msra.mxu0 0
        %436 = vmatprep.subr.bf16.mxu0 0
        %437 = vmatpush1.bf16.msra.mxu0 0
        %438 = vmatprep.mubr.bf16.mxu0 0
        %439 = vmatmul.mubr.bf16.gmra.mrb[0].mxu0 %v326
        %v440 = vpop.f32.mrb[0].mxu0
        %v441 = vadd.f32 %v260, %v440
        %v442 = vpop.f32.mrb[0].mxu0
        %v443 = vpop.f32.mrb[0].mxu0
        %v444 = vadd.f32 %v260, %v443
        %v445 = vpop.f32.mrb[0].mxu0
        %446 = vmatprep.mubr.bf16.mxu0 0
        %447 = vmatmul.mubr.bf16.gmra.mrb[0].mxu0 %v327
        %v448 = vpop.f32.mrb[0].mxu0
        %v449 = vadd.f32 %v260, %v448
        %v450 = vpop.f32.mrb[0].mxu0
        %v451 = vpop.f32.mrb[0].mxu0
        %v452 = vadd.f32 %v260, %v451
        %v453 = vpop.f32.mrb[0].mxu0
        %454 = vmatprep.mubr.bf16.mxu0 0
        %455 = vmatmul.mubr.bf16.gmra.mrb[0].mxu0 %v328
        %v456 = vpop.f32.mrb[0].mxu0
        %v457 = vadd.f32 %v260, %v456
        %v458 = vpop.f32.mrb[0].mxu0
        %v459 = vpop.f32.mrb[0].mxu0
        %v460 = vadd.f32 %v260, %v459
        %v461 = vpop.f32.mrb[0].mxu0
        %462 = vmatprep.mubr.bf16.mxu0 0
        %463 = vmatmul.mubr.bf16.gmra.mrb[0].mxu0 %v329
        %v464 = vpop.f32.mrb[0].mxu0
        %v465 = vadd.f32 %v260, %v464
        %v466 = vpop.f32.mrb[0].mxu0
        %v467 = vpop.f32.mrb[0].mxu0
        %v468 = vadd.f32 %v260, %v467
        %v469 = vpop.f32.mrb[0].mxu0
        %470 = vmatprep.mubr.bf16.mxu0 0
        %471 = vmatmul.mubr.bf16.gmra.mrb[0].mxu0 %v330
        %v472 = vpop.f32.mrb[0].mxu0
        %v473 = vadd.f32 %v260, %v472
        %v474 = vpop.f32.mrb[0].mxu0
        %v475 = vpop.f32.mrb[0].mxu0
        %v476 = vadd.f32 %v260, %v475
        %v477 = vpop.f32.mrb[0].mxu0
        %478 = vmatprep.mubr.bf16.mxu0 0
        %479 = vmatmul.mubr.bf16.gmra.mrb[0].mxu0 %v331
        %v480 = vpop.f32.mrb[0].mxu0
        %v481 = vadd.f32 %v260, %v480
        %v482 = vpop.f32.mrb[0].mxu0
        %v483 = vpop.f32.mrb[0].mxu0
        %v484 = vadd.f32 %v260, %v483
        %v485 = vpop.f32.mrb[0].mxu0
        %486 = vmatprep.mubr.bf16.mxu0 0
        %487 = vmatmul.mubr.bf16.gmra.mrb[0].mxu0 %v332
        %v488 = vpop.f32.mrb[0].mxu0
        %v489 = vadd.f32 %v260, %v488
        %v490 = vpop.f32.mrb[0].mxu0
        %v491 = vpop.f32.mrb[0].mxu0
        %v492 = vadd.f32 %v260, %v491
        %v493 = vpop.f32.mrb[0].mxu0
        %494 = vmatprep.mubr.bf16.mxu0 0
        %495 = vmatmul.mubr.bf16.gmra.mrb[0].mxu0 %v333
        %v496 = vpop.f32.mrb[0].mxu0
        %v497 = vadd.f32 %v260, %v496
        %v498 = vpop.f32.mrb[0].mxu0
        %v499 = vpop.f32.mrb[0].mxu0
        %v500 = vadd.f32 %v260, %v499
        %v501 = vpop.f32.mrb[0].mxu0
        %502 = vmatprep.mubr.bf16.mxu0 0
        %503 = vmatmul.mubr.bf16.gmra.mrb[0].mxu0 %v334
        %v504 = vpop.f32.mrb[0].mxu0
        %v505 = vadd.f32 %v260, %v504
        %v506 = vpop.f32.mrb[0].mxu0
        %v507 = vpop.f32.mrb[0].mxu0
        %v508 = vadd.f32 %v260, %v507
        %v509 = vpop.f32.mrb[0].mxu0
        %510 = vmatprep.mubr.bf16.mxu0 0
        %511 = vmatmul.mubr.bf16.gmra.mrb[0].mxu0 %v335
        %v512 = vpop.f32.mrb[0].mxu0
        %v513 = vadd.f32 %v260, %v512
        %v514 = vpop.f32.mrb[0].mxu0
        %v515 = vpop.f32.mrb[0].mxu0
        %v516 = vadd.f32 %v260, %v515
        %v517 = vpop.f32.mrb[0].mxu0
        %518 = vmatprep.mubr.bf16.mxu0 0
        %519 = vmatmul.mubr.bf16.gmra.mrb[0].mxu0 %v336
        %v520 = vpop.f32.mrb[0].mxu0
        %v521 = vadd.f32 %v260, %v520
        %v522 = vpop.f32.mrb[0].mxu0
        %v523 = vpop.f32.mrb[0].mxu0
        %v524 = vadd.f32 %v260, %v523
        %v525 = vpop.f32.mrb[0].mxu0
        %526 = vmatprep.mubr.bf16.mxu0 0
        %527 = vmatmul.mubr.bf16.gmra.mrb[0].mxu0 %v337
        %v528 = vpop.f32.mrb[0].mxu0
        %v529 = vadd.f32 %v260, %v528
        %v530 = vpop.f32.mrb[0].mxu0
        %v531 = vpop.f32.mrb[0].mxu0
        %v532 = vadd.f32 %v260, %v531
        %v533 = vpop.f32.mrb[0].mxu0
        %534 = vmatprep.mubr.bf16.mxu0 0
        %535 = vmatmul.mubr.bf16.gmra.mrb[0].mxu0 %v338
        %v536 = vpop.f32.mrb[0].mxu0
        %v537 = vadd.f32 %v260, %v536
        %v538 = vpop.f32.mrb[0].mxu0
        %v539 = vpop.f32.mrb[0].mxu0
        %v540 = vadd.f32 %v260, %v539
        %v541 = vpop.f32.mrb[0].mxu0
        %542 = vmatprep.mubr.bf16.mxu0 0
        %543 = vmatmul.mubr.bf16.gmra.mrb[0].mxu0 %v339
        %v544 = vpop.f32.mrb[0].mxu0
        %v545 = vadd.f32 %v260, %v544
        %v546 = vpop.f32.mrb[0].mxu0
        %v547 = vpop.f32.mrb[0].mxu0
        %v548 = vadd.f32 %v260, %v547
        %v549 = vpop.f32.mrb[0].mxu0
        %550 = vmatprep.mubr.bf16.mxu0 0
        %551 = vmatmul.mubr.bf16.gmra.mrb[0].mxu0 %v340
        %v552 = vpop.f32.mrb[0].mxu0
        %v553 = vadd.f32 %v260, %v552
        %v554 = vpop.f32.mrb[0].mxu0
        %v555 = vpop.f32.mrb[0].mxu0
        %v556 = vadd.f32 %v260, %v555
        %v557 = vpop.f32.mrb[0].mxu0
        %558 = vmatprep.mubr.bf16.mxu0 0
        %559 = vmatmul.mubr.bf16.gmra.mrb[0].mxu0 %v341
        %v560 = vpop.f32.mrb[0].mxu0
        %v561 = vadd.f32 %v260, %v560
        %v562 = vpop.f32.mrb[0].mxu0
        %v563 = vpop.f32.mrb[0].mxu0
        %v564 = vadd.f32 %v260, %v563
        %v565 = vpop.f32.mrb[0].mxu0
        %566 = vdwg.mxu0
        %v567 = vsub.f32 0.0, %v441
        %v568 = vsub.f32 0.0, %v444
        %v569 = vsub.f32 0.0, %v449
        %v570 = vsub.f32 0.0, %v452
        %v571 = vsub.f32 0.0, %v457
        %v572 = vsub.f32 0.0, %v460
        %v573 = vsub.f32 0.0, %v465
        %v574 = vsub.f32 0.0, %v468
        %v575 = vsub.f32 0.0, %v473
        %v576 = vsub.f32 0.0, %v476
        %v577 = vsub.f32 0.0, %v481
        %v578 = vsub.f32 0.0, %v484
        %v579 = vsub.f32 0.0, %v489
        %v580 = vsub.f32 0.0, %v492
        %v581 = vsub.f32 0.0, %v497
        %v582 = vsub.f32 0.0, %v500
        %v583 = vsub.f32 0.0, %v505
        %v584 = vsub.f32 0.0, %v508
        %v585 = vsub.f32 0.0, %v513
        %v586 = vsub.f32 0.0, %v516
        %v587 = vsub.f32 0.0, %v521
        %v588 = vsub.f32 0.0, %v524
        %v589 = vsub.f32 0.0, %v529
        %v590 = vsub.f32 0.0, %v532
        %v591 = vsub.f32 0.0, %v537
        %v592 = vsub.f32 0.0, %v540
        %v593 = vsub.f32 0.0, %v545
        %v594 = vsub.f32 0.0, %v548
        %v595 = vsub.f32 0.0, %v553
        %v596 = vsub.f32 0.0, %v556
        %v597 = vsub.f32 0.0, %v561
        %v598 = vsub.f32 0.0, %v564
        %v599 = vmul.f32 %v567, 1.442695
        %v600 = vpow.pop %v599
        %v601 = vmul.f32 %v568, 1.442695
        %v602 = vpow.pop %v601
        %v603 = vmul.f32 %v569, 1.442695
        %v604 = vpow.pop %v603
        %v605 = vmul.f32 %v570, 1.442695
        %v606 = vpow.pop %v605
        %v607 = vmul.f32 %v571, 1.442695
        %v608 = vpow.pop %v607
        %v609 = vmul.f32 %v572, 1.442695
        %v610 = vpow.pop %v609
        %v611 = vmul.f32 %v573, 1.442695
        %v612 = vpow.pop %v611
        %v613 = vmul.f32 %v574, 1.442695
        %v614 = vpow.pop %v613
        %v615 = vmul.f32 %v575, 1.442695
        %v616 = vpow.pop %v615
        %v617 = vmul.f32 %v576, 1.442695
        %v618 = vpow.pop %v617
        %v619 = vmul.f32 %v577, 1.442695
        %v620 = vpow.pop %v619
        %v621 = vmul.f32 %v578, 1.442695
        %v622 = vpow.pop %v621
        %v623 = vmul.f32 %v579, 1.442695
        %v624 = vpow.pop %v623
        %v625 = vmul.f32 %v580, 1.442695
        %v626 = vpow.pop %v625
        %v627 = vmul.f32 %v581, 1.442695
        %v628 = vpow.pop %v627
        %v629 = vmul.f32 %v582, 1.442695
        %v630 = vpow.pop %v629
        %v631 = vmul.f32 %v583, 1.442695
        %v632 = vpow.pop %v631
        %v633 = vmul.f32 %v584, 1.442695
        %v634 = vpow.pop %v633
        %v635 = vmul.f32 %v585, 1.442695
        %v636 = vpow.pop %v635
        %v637 = vmul.f32 %v586, 1.442695
        %v638 = vpow.pop %v637
        %v639 = vmul.f32 %v587, 1.442695
        %v640 = vpow.pop %v639
        %v641 = vmul.f32 %v588, 1.442695
        %v642 = vpow.pop %v641
        %v643 = vmul.f32 %v589, 1.442695
        %v644 = vpow.pop %v643
        %v645 = vmul.f32 %v590, 1.442695
        %v646 = vpow.pop %v645
        %v647 = vmul.f32 %v591, 1.442695
        %v648 = vpow.pop %v647
        %v649 = vmul.f32 %v592, 1.442695
        %v650 = vpow.pop %v649
        %v651 = vmul.f32 %v593, 1.442695
        %v652 = vpow.pop %v651
        %v653 = vmul.f32 %v594, 1.442695
        %v654 = vpow.pop %v653
        %v655 = vmul.f32 %v595, 1.442695
        %v656 = vpow.pop %v655
        %v657 = vmul.f32 %v596, 1.442695
        %v658 = vpow.pop %v657
        %v659 = vmul.f32 %v597, 1.442695
        %v660 = vpow.pop %v659
        %v661 = vmul.f32 %v598, 1.442695
        %v662 = vpow.pop %v661
        %v663 = vadd.f32 %v600, 1.0
        %v664 = vadd.f32 %v602, 1.0
        %v665 = vadd.f32 %v604, 1.0
        %v666 = vadd.f32 %v606, 1.0
        %v667 = vadd.f32 %v608, 1.0
        %v668 = vadd.f32 %v610, 1.0
        %v669 = vadd.f32 %v612, 1.0
        %v670 = vadd.f32 %v614, 1.0
        %v671 = vadd.f32 %v616, 1.0
        %v672 = vadd.f32 %v618, 1.0
        %v673 = vadd.f32 %v620, 1.0
        %v674 = vadd.f32 %v622, 1.0
        %v675 = vadd.f32 %v624, 1.0
        %v676 = vadd.f32 %v626, 1.0
        %v677 = vadd.f32 %v628, 1.0
        %v678 = vadd.f32 %v630, 1.0
        %v679 = vadd.f32 %v632, 1.0
        %v680 = vadd.f32 %v634, 1.0
        %v681 = vadd.f32 %v636, 1.0
        %v682 = vadd.f32 %v638, 1.0
        %v683 = vadd.f32 %v640, 1.0
        %v684 = vadd.f32 %v642, 1.0
        %v685 = vadd.f32 %v644, 1.0
        %v686 = vadd.f32 %v646, 1.0
        %v687 = vadd.f32 %v648, 1.0
        %v688 = vadd.f32 %v650, 1.0
        %v689 = vadd.f32 %v652, 1.0
        %v690 = vadd.f32 %v654, 1.0
        %v691 = vadd.f32 %v656, 1.0
        %v692 = vadd.f32 %v658, 1.0
        %v693 = vadd.f32 %v660, 1.0
        %v694 = vadd.f32 %v662, 1.0
        %v695 = vrcp.pop %v663
        %v696 = vrcp.pop %v664
        %v697 = vrcp.pop %v665
        %v698 = vrcp.pop %v666
        %v699 = vrcp.pop %v667
        %v700 = vrcp.pop %v668
        %v701 = vrcp.pop %v669
        %v702 = vrcp.pop %v670
        %v703 = vrcp.pop %v671
        %v704 = vrcp.pop %v672
        %v705 = vrcp.pop %v673
        %v706 = vrcp.pop %v674
        %v707 = vrcp.pop %v675
        %v708 = vrcp.pop %v676
        %v709 = vrcp.pop %v677
        %v710 = vrcp.pop %v678
        %v711 = vrcp.pop %v679
        %v712 = vrcp.pop %v680
        %v713 = vrcp.pop %v681
        %v714 = vrcp.pop %v682
        %v715 = vrcp.pop %v683
        %v716 = vrcp.pop %v684
        %v717 = vrcp.pop %v685
        %v718 = vrcp.pop %v686
        %v719 = vrcp.pop %v687
        %v720 = vrcp.pop %v688
        %v721 = vrcp.pop %v689
        %v722 = vrcp.pop %v690
        %v723 = vrcp.pop %v691
        %v724 = vrcp.pop %v692
        %v725 = vrcp.pop %v693
        %v726 = vrcp.pop %v694
        %v727 = vpack.c.bf16 %v696, %v695
        %v728 = vpack.c.bf16 %v698, %v697
        %v729 = vpack.c.bf16 %v700, %v699
        %v730 = vpack.c.bf16 %v702, %v701
        %v731 = vpack.c.bf16 %v704, %v703
        %v732 = vpack.c.bf16 %v706, %v705
        %v733 = vpack.c.bf16 %v708, %v707
        %v734 = vpack.c.bf16 %v710, %v709
        %v735 = vpack.c.bf16 %v712, %v711
        %v736 = vpack.c.bf16 %v714, %v713
        %v737 = vpack.c.bf16 %v716, %v715
        %v738 = vpack.c.bf16 %v718, %v717
        %v739 = vpack.c.bf16 %v720, %v719
        %v740 = vpack.c.bf16 %v722, %v721
        %v741 = vpack.c.bf16 %v724, %v723
        %v742 = vpack.c.bf16 %v726, %v725
        %v759 = vunpack.c.l.b16 %v727
        %v760 = vunpack.c.h.b16 %v727
        %v761 = vunpack.c.l.b16 %v728
        %v762 = vunpack.c.h.b16 %v728
        %v763 = vunpack.c.l.b16 %v729
        %v764 = vunpack.c.h.b16 %v729
        %v765 = vunpack.c.l.b16 %v730
        %v766 = vunpack.c.h.b16 %v730
        %v767 = vunpack.c.l.b16 %v731
        %v768 = vunpack.c.h.b16 %v731
        %v769 = vunpack.c.l.b16 %v732
        %v770 = vunpack.c.h.b16 %v732
        %v771 = vunpack.c.l.b16 %v733
        %v772 = vunpack.c.h.b16 %v733
        %v773 = vunpack.c.l.b16 %v734
        %v774 = vunpack.c.h.b16 %v734
        %v775 = vunpack.c.l.b16 %v735
        %v776 = vunpack.c.h.b16 %v735
        %v777 = vunpack.c.l.b16 %v736
        %v778 = vunpack.c.h.b16 %v736
        %v779 = vunpack.c.l.b16 %v737
        %v780 = vunpack.c.h.b16 %v737
        %v781 = vunpack.c.l.b16 %v738
        %v782 = vunpack.c.h.b16 %v738
        %v783 = vunpack.c.l.b16 %v739
        %v784 = vunpack.c.h.b16 %v739
        %v785 = vunpack.c.l.b16 %v740
        %v786 = vunpack.c.h.b16 %v740
        %v787 = vunpack.c.l.b16 %v741
        %v788 = vunpack.c.h.b16 %v741
        %v789 = vunpack.c.l.b16 %v742
        %v790 = vunpack.c.h.b16 %v742
        %v791 = vpack.c.b16 %v759, %v759
        %v792 = vpack.c.b16 %v760, %v760
        %v793 = vpack.c.b16 %v761, %v761
        %v794 = vpack.c.b16 %v762, %v762
        %v795 = vpack.c.b16 %v763, %v763
        %v796 = vpack.c.b16 %v764, %v764
        %v797 = vpack.c.b16 %v765, %v765
        %v798 = vpack.c.b16 %v766, %v766
        %v799 = vpack.c.b16 %v767, %v767
        %v800 = vpack.c.b16 %v768, %v768
        %v801 = vpack.c.b16 %v769, %v769
        %v802 = vpack.c.b16 %v770, %v770
        %v803 = vpack.c.b16 %v771, %v771
        %v804 = vpack.c.b16 %v772, %v772
        %v805 = vpack.c.b16 %v773, %v773
        %v806 = vpack.c.b16 %v774, %v774
        %v807 = vpack.c.b16 %v775, %v775
        %v808 = vpack.c.b16 %v776, %v776
        %v809 = vpack.c.b16 %v777, %v777
        %v810 = vpack.c.b16 %v778, %v778
        %v811 = vpack.c.b16 %v779, %v779
        %v812 = vpack.c.b16 %v780, %v780
        %v813 = vpack.c.b16 %v781, %v781
        %v814 = vpack.c.b16 %v782, %v782
        %v815 = vpack.c.b16 %v783, %v783
        %v816 = vpack.c.b16 %v784, %v784
        %v817 = vpack.c.b16 %v785, %v785
        %v818 = vpack.c.b16 %v786, %v786
        %v819 = vpack.c.b16 %v787, %v787
        %v820 = vpack.c.b16 %v788, %v788
        %v821 = vpack.c.b16 %v789, %v789
        %v822 = vpack.c.b16 %v790, %v790
        %855 = vst [vmem:[%s203] sm:$0xf] %v791
        %856 = vst [vmem:[%s203 + $0x4] sm:$0xf] %v792
        %857 = vst [vmem:[%s203 + $0x8] sm:$0xf] %v793
        %858 = vst [vmem:[%s203 + $0xc] sm:$0xf] %v794
        %859 = vst [vmem:[%s203 + $0x10] sm:$0xf] %v795
        %860 = vst [vmem:[%s203 + $0x14] sm:$0xf] %v796
        %861 = vst [vmem:[%s203 + $0x18] sm:$0xf] %v797
        %862 = vst [vmem:[%s203 + $0x1c] sm:$0xf] %v798
        %863 = vst [vmem:[%s203 + $0x20] sm:$0xf] %v799
        %864 = vst [vmem:[%s203 + $0x24] sm:$0xf] %v800
        %865 = vst [vmem:[%s203 + $0x28] sm:$0xf] %v801
        %866 = vst [vmem:[%s203 + $0x2c] sm:$0xf] %v802
        %867 = vst [vmem:[%s203 + $0x30] sm:$0xf] %v803
        %868 = vst [vmem:[%s203 + $0x34] sm:$0xf] %v804
        %869 = vst [vmem:[%s203 + $0x38] sm:$0xf] %v805
        %870 = vst [vmem:[%s203 + $0x3c] sm:$0xf] %v806
        %871 = vst [vmem:[%s203 + $0x40] sm:$0xf] %v807
        %872 = vst [vmem:[%s203 + $0x44] sm:$0xf] %v808
        %873 = vst [vmem:[%s203 + $0x48] sm:$0xf] %v809
        %874 = vst [vmem:[%s203 + $0x4c] sm:$0xf] %v810
        %875 = vst [vmem:[%s203 + $0x50] sm:$0xf] %v811
        %876 = vst [vmem:[%s203 + $0x54] sm:$0xf] %v812
        %877 = vst [vmem:[%s203 + $0x58] sm:$0xf] %v813
        %878 = vst [vmem:[%s203 + $0x5c] sm:$0xf] %v814
        %879 = vst [vmem:[%s203 + $0x60] sm:$0xf] %v815
        %880 = vst [vmem:[%s203 + $0x64] sm:$0xf] %v816
        %881 = vst [vmem:[%s203 + $0x68] sm:$0xf] %v817
        %882 = vst [vmem:[%s203 + $0x6c] sm:$0xf] %v818
        %883 = vst [vmem:[%s203 + $0x70] sm:$0xf] %v819
        %884 = vst [vmem:[%s203 + $0x74] sm:$0xf] %v820
        %885 = vst [vmem:[%s203 + $0x78] sm:$0xf] %v821
        %886 = vst [vmem:[%s203 + $0x7c] sm:$0xf] %v822
        %s887 = sand.u32 %s97, 1
        %s888 = scalar_lea.sflag [#allocation4], %s887
        %s889 = sand.u32 %s97, 1
        %s890 = smul.addr %s889, 128
        %s891 = scalar_lea.vmem [#allocation7], %s890
        // Predicated region
        $region41: #{tpu_custom_call.1} parent=31 // pred_check
          %p892 = pneg %p107
        $region42: #{tpu_custom_call.1} parent=31 // pred_check_branch
          %894 = sbr.rel (%p892) target = $region44
        $region43: #{tpu_custom_call.1} parent=31 // pred_region
          %s895 = smul.u32 32, %s21
          %s897 = ssub.s32 2048, 2048
          %898 = vsyncadd %s888, %s897
          %s899 = smul.addr %s895, 64
          %s900 = scalar_lea.hbm %s3, %s899
          %s901 = sshll.u32 %s891, 4
          %s902 = int_to_ptr.vmem [resolvable:$true] %s901
          %907 = dma.vmem_to_hbm [thread:$0]  %s902, 2048, %s900, %s888, 64, 64, 4
        $region44: #{tpu_custom_call.1} parent=31 // pred_fallthru
          _
      $region32: #{tpu_custom_call.1} parent=5 // pred_fallthru
        _
      %p908 = scmp.le.s32.totalorder 2, %s16
      // Predicated region
      $region45: #{tpu_custom_call.1} parent=5 // pred_check
        %p909 = pneg %p908
      $region46: #{tpu_custom_call.1} parent=5 // pred_check_branch
        %911 = sbr.rel (%p909) target = $region48
      $region47: #{tpu_custom_call.1} parent=5 // pred_region
        %s912 = ssub.s32 %s16, 2
        // Predicated region
        $region49: #{tpu_custom_call.1} parent=47 // pred_check
          %p913 = pneg %p113
        $region50: #{tpu_custom_call.1} parent=47 // pred_check_branch
          %915 = sbr.rel (%p913) target = $region52
        $region51: #{tpu_custom_call.1} parent=47 // pred_region
          %s916 = sand.u32 %s98, 1
          %s917 = scalar_lea.sflag [#allocation4], %s916
          %s918 = sand.u32 %s98, 1
          %s919 = smul.addr %s918, 128
          %s920 = scalar_lea.vmem [#allocation7], %s919
          %921 = dma.done %s917, 2048
        $region52: #{tpu_custom_call.1} parent=47 // pred_fallthru
          _
      $region48: #{tpu_custom_call.1} parent=5 // pred_fallthru
        _
    $region6: #{tpu_custom_call.1} parent=1 // loop_footer
      %s20 = sadd.s32 1, %s16
    $region7: #{tpu_custom_call.1} parent=1 // loop_footer_branch
      %15 = sbr.rel target = $region3
    $region8: #{tpu_custom_call.1} parent=1 // loop_exit
      _
    %922 = vsyncpa [#allocation3], 1
    %s923 = scalar_lea.sflag [#allocation3], 1
    %924 = vsyncpa %s923, 1
    %925 = vsyncpa [#allocation6], 1
    %926 = vsyncpa [#allocation4], 1
    %s927 = scalar_lea.sflag [#allocation4], 1
    %928 = vsyncpa %s927, 1

</llo_original>
